<compile_context>
chip_gen: v7x
topology: tpu7x:2x2x1
jax: 0.10.0
libtpu: 0.0.40
codegen_flags: <defaults>
</compile_context>

<pallas_src>
import functools

import jax
import jax.numpy as jnp
from jax import lax
from jax.experimental import pallas as pl
from jax.experimental.pallas import tpu as pltpu


def _mlpblock_kernel(x_ref, w_ref, alpha_ref, beta_ref, seg_ref, segt_ref,
                     o_ref, *, inv_d, eps):
    # x_ref:     (N, BB*D)  activation slab (lane axis: local-batch-major, dim-minor)
    # w_ref:     (N, N)     fc0 weight, PyTorch [out, in] convention
    # alpha_ref: (1, BB*D)  LN scale, tiled over the BB batches in the block
    # beta_ref:  (1, BB*D)  LN shift, tiled likewise
    # seg_ref:   (BB*D, BB) one-hot segment-sum matrix (column b == local batch b)
    # segt_ref:  (BB, BB*D) its transpose (broadcast-back matrix)
    x = x_ref[...]                      # native dtype (bf16 stays bf16 for the MXU)
    n = x.shape[0]

    # Temporal_FC on the last (seq) axis: Y^T = W @ X^T, f32 accumulation.
    # fc0 bias omitted: constant within each LN(dim) segment -> cancels in y - mean.
    # TODO(synk): re-add the bias if use_norm=False or layernorm_axis != 'spatial'.
    y = jnp.dot(w_ref[...], x, preferred_element_type=jnp.float32)   # (N, L) f32

    # LayerNorm over the dim axis == per-(n, batch) segment of length D along
    # the lane axis.  Stacked segment-sum matmul gives E[y] and E[y^2] in one
    # MXU push; stacked broadcast-back returns (scale, shift) in one more.
    stats = jnp.dot(jnp.concatenate([y, y * y], axis=0), seg_ref[...],
                    preferred_element_type=jnp.float32) * inv_d      # (2N, BB)
    mean = stats[:n, :]
    var = jnp.maximum(stats[n:, :] - mean * mean, 0.0)
    rstd = lax.rsqrt(var + eps)
    coeff = jnp.concatenate([rstd, -mean * rstd], axis=0)            # (2N, BB)
    coeff_b = jnp.dot(coeff, segt_ref[...],
                      preferred_element_type=jnp.float32)            # (2N, L)
    y_norm = (y * coeff_b[:n, :] + coeff_b[n:, :]) * alpha_ref[...] + beta_ref[...]

    # Residual add in f32, cast back to the activation dtype.
    o_ref[...] = (x.astype(jnp.float32) + y_norm).astype(o_ref.dtype)


def _vmem_limit_bytes():
    """Scoped-VMEM request derived from the chip (128 MiB physical on v5e/v6e,
    64 MiB on v7x): half of physical, capped at 64 MiB, floor 16 MiB."""
    try:
        cap = int(pltpu.get_tpu_info().vmem_capacity_bytes)
    except Exception:
        cap = 64 << 20   # conservative (v7x per-core physical)
    return max(16 << 20, min(cap // 2, 64 << 20))


def _choose_block_b(B, D, N, itemsize, *, target_block_bytes, max_lanes=512):
    """Pick the batch-block size BB.

    Constraints / preferences:
      * BB < B so the grid has >= 2 steps (pipeline overlap of DMA/compute).
      * BB*D % 128 == 0 -> lane-dense, unmasked loads/stores.
      * the (N, BB*D) tile fits the per-tile byte budget.
      * prefer an even step count (shards across v7x's two TensorCores), then
        BB*D <= max_lanes (vreg pressure), then the largest BB.
    """
    candidates = []
    for bb in range(1, B):
        if B % bb:
            continue
        if (bb * D) % 128 != 0:
            continue
        if N * bb * D * itemsize > target_block_bytes:
            continue
        steps = B // bb
        candidates.append(((steps % 2 == 0), (bb * D <= max_lanes), bb))
    if candidates:
        return max(candidates)[2]
    # Fallback: no lane-dense sub-batch block exists.  A full-batch block is a
    # legal BlockSpec (block == full array) but only if it fits the budget.
    if N * B * D * itemsize <= target_block_bytes:
        return B
    raise ValueError(
        f"Cannot tile batch={B}, dim={D}, seq={N}: no divisor bb of the batch "
        f"with bb*dim % 128 == 0 fits {target_block_bytes} bytes per tile; "
        f"pass block_b explicitly.")


def make_mlpblock(w, alpha, beta, *, batch, dim, seq, dtype=jnp.float32,
                  eps=1e-5, block_b=None, bias=None):
    """Build the pallas_call and all grid-invariant constants once.

    Returns `apply_t(x_t)` acting on the transposed activation slab
    x_t : (seq, batch*dim).  In a multi-block network keep that layout between
    blocks; the [B, D, N] <-> (N, B*D) transposes in `mlpblock_forward` are
    adaptation plumbing only.
    """
    del bias  # fc0 bias cancels exactly under LN over the dim axis.
    B, D, N = batch, dim, seq
    dtype = jnp.dtype(dtype)
    itemsize = dtype.itemsize
    vmem_limit = _vmem_limit_bytes()
    if block_b is None:
        block_b = _choose_block_b(
            B, D, N, itemsize,
            target_block_bytes=min(4 << 20, vmem_limit // 8))
    bb = block_b
    if B % bb != 0:
        raise ValueError(f"block_b={bb} must divide batch={B}")
    if bb != B and (bb * D) % 128 != 0:
        raise ValueError("block_b*dim must be a multiple of 128 (lane-dense "
                         "tiles) unless block_b == batch")

    w_c = jnp.asarray(w, dtype)                                         # (N, N)
    alpha_t = jnp.tile(jnp.asarray(alpha, jnp.float32), bb).reshape(1, bb * D)
    beta_t = jnp.tile(jnp.asarray(beta, jnp.float32), bb).reshape(1, bb * D)
    seg = (jnp.arange(bb * D, dtype=jnp.int32)[:, None] // D
           == jnp.arange(bb, dtype=jnp.int32)[None, :]).astype(jnp.float32)
    seg_t = seg.T

    kernel = functools.partial(_mlpblock_kernel, inv_d=1.0 / D, eps=eps)

    call = pl.pallas_call(
        kernel,
        out_shape=jax.ShapeDtypeStruct((N, B * D), dtype),
        grid_spec=pltpu.PrefetchScalarGridSpec(
            num_scalar_prefetch=0,
            grid=(B // bb,),
            in_specs=[
                pl.BlockSpec((N, bb * D), lambda i: (0, i)),    # x slab (per step)
                pl.BlockSpec((N, N), lambda i: (0, 0)),         # weight (resident)
                pl.BlockSpec((1, bb * D), lambda i: (0, 0)),    # alpha (resident)
                pl.BlockSpec((1, bb * D), lambda i: (0, 0)),    # beta  (resident)
                pl.BlockSpec((bb * D, bb), lambda i: (0, 0)),   # seg   (resident)
                pl.BlockSpec((bb, bb * D), lambda i: (0, 0)),   # seg^T (resident)
            ],
            out_specs=pl.BlockSpec((N, bb * D), lambda i: (0, i)),
        ),
        compiler_params=pltpu.CompilerParams(
            # batch-block axis is independent -> shards across v7x's two TCs.
            dimension_semantics=("parallel",),
            vmem_limit_bytes=vmem_limit,
        ),
    )

    def apply_t(x_t):
        return call(x_t.astype(dtype), w_c, alpha_t, beta_t, seg, seg_t)

    return apply_t


def mlpblock_forward(x, w, bias, alpha, beta, *, eps=1e-5, block_b=None):
    """x: [B, D, N] (PyTorch layout); w: [N, N] ([out, in]); bias: [N]; alpha, beta: [D]."""
    B, D, N = x.shape
    apply_t = make_mlpblock(w, alpha, beta, batch=B, dim=D, seq=N,
                            dtype=x.dtype, eps=eps, block_b=block_b, bias=bias)
    # Lane-dense transposed slab (N, B*D); keep this layout between blocks in a
    # multi-block model (these two transposes are adaptation plumbing only).
    x_t = jnp.transpose(x, (2, 0, 1)).reshape(N, B * D)
    out_t = apply_t(x_t)
    return out_t.reshape(N, B, D).transpose(1, 2, 0)


def init_params(key, dim, seq):
    """Deterministic init matching MLPblock.reset_parameters()."""
    gain = 1e-8  # xavier_uniform_(weight, gain=1e-8)
    a = gain * (6.0 / (seq + seq)) ** 0.5
    w = jax.random.uniform(key, (seq, seq), jnp.float32, minval=-a, maxval=a)
    bias = jnp.zeros((seq,), jnp.float32)
    alpha = jnp.ones((dim,), jnp.float32)   # LN(dim): alpha = 1, beta = 0
    beta = jnp.zeros((dim,), jnp.float32)
    return w, bias, alpha, beta


def mlpblock_reference(x, w, bias, alpha, beta, eps=1e-5):
    """Pure-JAX reference mirroring the PyTorch forward (f32)."""
    x = x.astype(jnp.float32)
    y = jnp.einsum("bdk,nk->bdn", x, w.astype(jnp.float32)) + bias[None, None, :]
    mean = jnp.mean(y, axis=1, keepdims=True)
    var = jnp.mean((y - mean) ** 2, axis=1, keepdims=True)
    std = jnp.sqrt(var + eps)
    y = (y - mean) / std
    y = y * alpha[None, :, None] + beta[None, :, None]
    return x + y


if __name__ == "__main__":
    B, DIM, SEQ = 16, 48, 32  # batch, dim (joints*3), seq (frames)

    key = jax.random.PRNGKey(0)
    kx, kw, kb, ka, kbt = jax.random.split(key, 5)
    x = jax.random.normal(kx, (B, DIM, SEQ), jnp.float32)
    # Non-degenerate parameters so the FC + LN math is actually exercised.
    w = 0.1 * jax.random.normal(kw, (SEQ, SEQ), jnp.float32)
    bias = 0.1 * jax.random.normal(kb, (SEQ,), jnp.float32)
    alpha = 1.0 + 0.1 * jax.random.normal(ka, (DIM,), jnp.float32)
    beta = 0.1 * jax.random.normal(kbt, (DIM,), jnp.float32)

    ref = mlpblock_reference(x, w, bias, alpha, beta)

    # Explicit block: 2 grid steps of 8 batches, lane width 8*48 = 384 (3*128).
    out = jax.block_until_ready(
        mlpblock_forward(x, w, bias, alpha, beta, block_b=8))
    assert out.shape == (B, DIM, SEQ)
    err = float(jnp.max(jnp.abs(out - ref)))
    assert err < 1e-4, f"mismatch vs reference (block_b=8): {err}"

    # Auto-chosen block size (must also give >= 2 grid steps now).
    out2 = jax.block_until_ready(mlpblock_forward(x, w, bias, alpha, beta))
    err2 = float(jnp.max(jnp.abs(out2 - ref)))
    assert err2 < 1e-4, f"mismatch vs reference (auto block): {err2}"

    # Module-faithful init (xavier gain=1e-8, zero bias, unit LN) also matches.
    w0, b0, a0, be0 = init_params(kw, DIM, SEQ)
    out3 = jax.block_until_ready(mlpblock_forward(x, w0, b0, a0, be0))
    ref3 = mlpblock_reference(x, w0, b0, a0, be0)
    assert float(jnp.max(jnp.abs(out3 - ref3))) < 1e-4

    # bf16 activations + weights (halved HBM bytes); LN stays in f32 in-kernel.
    out_bf = jax.block_until_ready(
        mlpblock_forward(x.astype(jnp.bfloat16), w.astype(jnp.bfloat16),
                         bias, alpha, beta))
    assert out_bf.dtype == jnp.bfloat16 and out_bf.shape == (B, DIM, SEQ)
    err_bf = float(jnp.max(jnp.abs(out_bf.astype(jnp.float32) - ref)))
    assert err_bf < 8e-2, f"bf16 mismatch vs f32 reference: {err_bf}"

    print("KERNEL_OK")
</pallas_src>

<mosaic_0001>
module attributes {stable_mosaic.version = 11 : i64} {
  func.func @_mlpblock_kernel(%arg0: i32, %arg1: memref<32x384xf32, #tpu.memory_space<vmem>>, %arg2: memref<32x32xf32, #tpu.memory_space<vmem>>, %arg3: memref<1x384xf32, #tpu.memory_space<vmem>>, %arg4: memref<1x384xf32, #tpu.memory_space<vmem>>, %arg5: memref<384x8xf32, #tpu.memory_space<vmem>>, %arg6: memref<8x384xf32, #tpu.memory_space<vmem>>, %arg7: memref<32x384xf32, #tpu.memory_space<vmem>>) attributes {dimension_semantics = [#tpu.dimension_semantics<parallel>], iteration_bounds = array<i64: 2>, scalar_prefetch = 0 : i64, scratch_operands = 0 : i64, tpu.core_type = #tpu.core_type<tc>, window_params = [{transform_indices = @transform_0, window_bounds = array<i64: 32, 384>}, {pipeline_mode = #tpu.pipeline_mode<synchronous>, transform_indices = @transform_1, window_bounds = array<i64: 32, 32>}, {pipeline_mode = #tpu.pipeline_mode<synchronous>, transform_indices = @transform_2, window_bounds = array<i64: 1, 384>}, {pipeline_mode = #tpu.pipeline_mode<synchronous>, transform_indices = @transform_3, window_bounds = array<i64: 1, 384>}, {pipeline_mode = #tpu.pipeline_mode<synchronous>, transform_indices = @transform_4, window_bounds = array<i64: 384, 8>}, {pipeline_mode = #tpu.pipeline_mode<synchronous>, transform_indices = @transform_5, window_bounds = array<i64: 8, 384>}, {transform_indices = @transform_6, window_bounds = array<i64: 32, 384>}]} {
    %c0 = arith.constant 0 : index
    %c0_0 = arith.constant 0 : index
    %0 = vector.load %arg1[%c0, %c0_0] : memref<32x384xf32, #tpu.memory_space<vmem>>, vector<32x384xf32>
    %c0_1 = arith.constant 0 : index
    %c0_2 = arith.constant 0 : index
    %1 = vector.load %arg2[%c0_1, %c0_2] : memref<32x32xf32, #tpu.memory_space<vmem>>, vector<32x32xf32>
    %cst = arith.constant dense<0.000000e+00> : vector<32x384xf32>
    %2 = tpu.matmul %1, %0, %cst {dimension_numbers = #tpu.dot_dimension_numbers<[1], [0], [0], [1], [0, 0, 1, 1], [], []>} : vector<32x32xf32>, vector<32x384xf32>, vector<32x384xf32> -> vector<32x384xf32>
    %3 = arith.mulf %2, %2 : vector<32x384xf32>
    %4 = tpu.concatenate %2, %3 in 0 : vector<32x384xf32>, vector<32x384xf32> -> vector<64x384xf32>
    %c0_3 = arith.constant 0 : index
    %c0_4 = arith.constant 0 : index
    %5 = vector.load %arg5[%c0_3, %c0_4] : memref<384x8xf32, #tpu.memory_space<vmem>>, vector<384x8xf32>
    %cst_5 = arith.constant dense<0.000000e+00> : vector<64x8xf32>
    %6 = tpu.matmul %4, %5, %cst_5 {dimension_numbers = #tpu.dot_dimension_numbers<[1], [0], [0], [1], [0, 0, 1, 1], [], []>} : vector<64x384xf32>, vector<384x8xf32>, vector<64x8xf32> -> vector<64x8xf32>
    %cst_6 = arith.constant 0.020833334 : f32
    %7 = vector.broadcast %cst_6 : f32 to vector<64x8xf32>
    %8 = arith.mulf %6, %7 : vector<64x8xf32>
    %9 = vector.extract_strided_slice %8 {offsets = [0, 0], sizes = [32, 8], strides = [1, 1]} : vector<64x8xf32> to vector<32x8xf32>
    %10 = vector.extract_strided_slice %8 {offsets = [32, 0], sizes = [32, 8], strides = [1, 1]} : vector<64x8xf32> to vector<32x8xf32>
    %11 = arith.mulf %9, %9 : vector<32x8xf32>
    %12 = arith.subf %10, %11 : vector<32x8xf32>
    %cst_7 = arith.constant 0.000000e+00 : f32
    %13 = vector.broadcast %cst_7 : f32 to vector<32x8xf32>
    %14 = arith.maximumf %12, %13 : vector<32x8xf32>
    %cst_8 = arith.constant 9.99999974E-6 : f32
    %15 = vector.broadcast %cst_8 : f32 to vector<32x8xf32>
    %16 = arith.addf %14, %15 : vector<32x8xf32>
    %17 = math.rsqrt %16 : vector<32x8xf32>
    %cst_9 = arith.constant 0.000000e+00 : f32
    %18 = vector.broadcast %cst_9 : f32 to vector<32x8xf32>
    %19 = arith.subf %18, %9 : vector<32x8xf32>
    %20 = arith.mulf %19, %17 : vector<32x8xf32>
    %21 = tpu.concatenate %17, %20 in 0 : vector<32x8xf32>, vector<32x8xf32> -> vector<64x8xf32>
    %c0_10 = arith.constant 0 : index
    %c0_11 = arith.constant 0 : index
    %22 = vector.load %arg6[%c0_10, %c0_11] : memref<8x384xf32, #tpu.memory_space<vmem>>, vector<8x384xf32>
    %cst_12 = arith.constant dense<0.000000e+00> : vector<64x384xf32>
    %23 = tpu.matmul %21, %22, %cst_12 {dimension_numbers = #tpu.dot_dimension_numbers<[1], [0], [0], [1], [0, 0, 1, 1], [], []>} : vector<64x8xf32>, vector<8x384xf32>, vector<64x384xf32> -> vector<64x384xf32>
    %24 = vector.extract_strided_slice %23 {offsets = [0, 0], sizes = [32, 384], strides = [1, 1]} : vector<64x384xf32> to vector<32x384xf32>
    %25 = arith.mulf %2, %24 : vector<32x384xf32>
    %26 = vector.extract_strided_slice %23 {offsets = [32, 0], sizes = [32, 384], strides = [1, 1]} : vector<64x384xf32> to vector<32x384xf32>
    %27 = arith.addf %25, %26 : vector<32x384xf32>
    %c0_13 = arith.constant 0 : index
    %c0_14 = arith.constant 0 : index
    %28 = vector.load %arg3[%c0_13, %c0_14] : memref<1x384xf32, #tpu.memory_space<vmem>>, vector<1x384xf32>
    %29 = vector.broadcast %28 : vector<1x384xf32> to vector<32x384xf32>
    %30 = arith.mulf %27, %29 : vector<32x384xf32>
    %c0_15 = arith.constant 0 : index
    %c0_16 = arith.constant 0 : index
    %31 = vector.load %arg4[%c0_15, %c0_16] : memref<1x384xf32, #tpu.memory_space<vmem>>, vector<1x384xf32>
    %32 = vector.broadcast %31 : vector<1x384xf32> to vector<32x384xf32>
    %33 = arith.addf %30, %32 : vector<32x384xf32>
    %34 = arith.addf %0, %33 : vector<32x384xf32>
    %c0_17 = arith.constant 0 : index
    %c0_18 = arith.constant 0 : index
    %35 = vector.load %arg7[%c0_17, %c0_18] : memref<32x384xf32, #tpu.memory_space<vmem>>, vector<32x384xf32>
    tpu.vector_store %arg7[%c0_17, %c0_18], %34 {strides = array<i32>} : memref<32x384xf32, #tpu.memory_space<vmem>>, vector<32x384xf32>,
    return
  }
  func.func @transform_0(%arg0: i32) -> (i32, i32) {
    %c0_i32 = arith.constant 0 : i32
    %c0_i32_0 = arith.constant 0 : i32
    return %c0_i32, %arg0 : i32, i32
  }
  func.func @transform_1(%arg0: i32) -> (i32, i32) {
    %c0_i32 = arith.constant 0 : i32
    %c0_i32_0 = arith.constant 0 : i32
    %c0_i32_1 = arith.constant 0 : i32
    return %c0_i32, %c0_i32_0 : i32, i32
  }
  func.func @transform_2(%arg0: i32) -> (i32, i32) {
    %c0_i32 = arith.constant 0 : i32
    %c0_i32_0 = arith.constant 0 : i32
    %c0_i32_1 = arith.constant 0 : i32
    return %c0_i32, %c0_i32_0 : i32, i32
  }
  func.func @transform_3(%arg0: i32) -> (i32, i32) {
    %c0_i32 = arith.constant 0 : i32
    %c0_i32_0 = arith.constant 0 : i32
    %c0_i32_1 = arith.constant 0 : i32
    return %c0_i32, %c0_i32_0 : i32, i32
  }
  func.func @transform_4(%arg0: i32) -> (i32, i32) {
    %c0_i32 = arith.constant 0 : i32
    %c0_i32_0 = arith.constant 0 : i32
    %c0_i32_1 = arith.constant 0 : i32
    return %c0_i32, %c0_i32_0 : i32, i32
  }
  func.func @transform_5(%arg0: i32) -> (i32, i32) {
    %c0_i32 = arith.constant 0 : i32
    %c0_i32_0 = arith.constant 0 : i32
    %c0_i32_1 = arith.constant 0 : i32
    return %c0_i32, %c0_i32_0 : i32, i32
  }
  func.func @transform_6(%arg0: i32) -> (i32, i32) {
    %c0_i32 = arith.constant 0 : i32
    %c0_i32_0 = arith.constant 0 : i32
    return %c0_i32, %arg0 : i32, i32
  }
}

</mosaic_0001>

<llo_original>
// kernel: tpu_custom_call.1
$region0: #{tpu_custom_call.1}
  #allocation0 [shape = 'u32[]', space=smem, size = 0x4, offset = 0x4, fixed_abs, tag = 'smem constant byte address 0x4 - core index']
  #allocation1 [shape = 'u32[144,128]{1,0:T(1,128)}', space=vmem, size = 0x12000, scoped, tag = 'internal scratch']
  %s0 = inlined_call_operand.vmem [shape: f32[32,768], index: 0, kind: input, shape index: {}]
  %s1 = inlined_call_operand.vmem [shape: f32[32,32], index: 1, kind: input, shape index: {}]
  %s2 = inlined_call_operand.vmem [shape: f32[1,384], index: 2, kind: input, shape index: {}]
  %s3 = inlined_call_operand.vmem [shape: f32[1,384], index: 3, kind: input, shape index: {}]
  %s4 = inlined_call_operand.vmem [shape: f32[384,8], index: 4, kind: input, shape index: {}]
  %s5 = inlined_call_operand.vmem [shape: f32[8,384], index: 5, kind: input, shape index: {}]
  %s6 = inlined_call_operand.hbm [shape: f32[32,768], index: 6, kind: output, shape index: {}]
  %s7 = sld [smem:[#allocation0]]
  $region80: #{tpu_custom_call.1} parent=0
    _
  %s9 = ssub.s32 1, %s7
  %s10 = scalar_select 0, %s9, %s7
  $region1: #{tpu_custom_call.1} parent=0
    #allocation2 [shape = 'u8[98304]{0}', space=vmem, size = 0x18000, scoped, tag = 'input window, operand 0']
    #allocation3 [shape = 'u8[98304]{0}', space=vmem, size = 0x18000, scoped, tag = 'output window, operand 0']
    #allocation4 [shape = 's32[2]{0}', space=sflag, size = 0x8, scoped, tag = 'scoped memory for tpu_custom_call.1']
    %11 = vsyncpa [#allocation4], 0
    %s12 = scalar_lea.sflag [#allocation4], 1
    %13 = vsyncpa %s12, 0
    loop: start=0, step=1, limit=4
    $region2: #{tpu_custom_call.1} parent=1 // loop_pre_header
      _
    $region3: #{tpu_custom_call.1} parent=1 // loop_header
      %s15 = sphi 0, %s19
      %p16 = scmp.ge.s32.totalorder %s15, 4
      %s25 = sphi 0, %s27
      %s28 = sphi 0, %s25
      %s29 = sphi 0, %s28
      %s45 = sphi 0, %s29
      %s49 = sphi 0, %s49
      %s51 = sphi 0, %s49
      %s52 = sphi 0, %s51
      %s66 = sphi 0, %s52
      %s70 = sphi 0, %s70
      %s72 = sphi 0, %s70
      %s73 = sphi 0, %s72
      %s87 = sphi 0, %s73
      %s91 = sphi 0, %s91
      %s93 = sphi 0, %s91
      %s94 = sphi 0, %s93
      %s108 = sphi 0, %s94
      %s112 = sphi 0, %s112
      %s114 = sphi 0, %s112
      %s115 = sphi 0, %s114
      %s129 = sphi 0, %s115
      %s133 = sphi 0, %s133
      %s135 = sphi 0, %s133
      %s136 = sphi 0, %s135
      %s150 = sphi 0, %s136
      %s156 = sphi 0, %s158
      %s159 = sphi 0, %s156
      %s160 = sphi 0, %s159
      %s176 = sphi 0, %s160
    $region4: #{tpu_custom_call.1} parent=1 // loop_header_branch
      %18 = sbr.rel (%p16) target = $region8
    $region5: #{tpu_custom_call.1} parent=1 // loop_body
      %s20 = ssub.s32 %s15, 1
      %s21 = ssub.s32 %s15, 2
      %s22 = sadd.s32 %s15, 1
      %s23 = ssub.s32 %s15, %s22
      %p24 = scmp.eq.s32.totalorder %s23, 0
      %s26 = sadd.s32 %s25, 1
      %s27 = scalar_select %p24, %s25, %s26
      %p30 = pneg %p24
      %p31 = scmp.eq.s32.totalorder %s15, 1
      %p32 = por %p30, %p31
      %p33 = scmp.ne.s32.totalorder %s25, %s28
      %p34 = scmp.eq.s32.totalorder %s15, 0
      %p35 = por %p33, %p34
      %p36 = scmp.ne.s32.totalorder %s25, %s28
      %p37 = scmp.eq.s32.totalorder %s20, 1
      %p38 = por %p36, %p37
      %p39 = scmp.ne.s32.totalorder %s28, %s29
      %p40 = scmp.eq.s32.totalorder %s20, 0
      %p41 = por %p39, %p40
      %p42 = scmp.ne.s32.totalorder %s28, %s29
      %p43 = scmp.eq.s32.totalorder %s21, 1
      %p44 = por %p42, %p43
      %p46 = scmp.ne.s32.totalorder %s29, %s45
      %p47 = scmp.eq.s32.totalorder %s21, 0
      %p48 = por %p46, %p47
      %s50 = sadd.s32 %s49, 1
      %p53 = scmp.eq.s32.totalorder %s15, 1
      %p54 = scmp.ne.s32.totalorder %s49, %s51
      %p55 = scmp.eq.s32.totalorder %s15, 0
      %p56 = por %p54, %p55
      %p57 = scmp.ne.s32.totalorder %s49, %s51
      %p58 = scmp.eq.s32.totalorder %s20, 1
      %p59 = por %p57, %p58
      %p60 = scmp.ne.s32.totalorder %s51, %s52
      %p61 = scmp.eq.s32.totalorder %s20, 0
      %p62 = por %p60, %p61
      %p63 = scmp.ne.s32.totalorder %s51, %s52
      %p64 = scmp.eq.s32.totalorder %s21, 1
      %p65 = por %p63, %p64
      %p67 = scmp.ne.s32.totalorder %s52, %s66
      %p68 = scmp.eq.s32.totalorder %s21, 0
      %p69 = por %p67, %p68
      %s71 = sadd.s32 %s70, 1
      %p74 = scmp.eq.s32.totalorder %s15, 1
      %p75 = scmp.ne.s32.totalorder %s70, %s72
      %p76 = scmp.eq.s32.totalorder %s15, 0
      %p77 = por %p75, %p76
      %p78 = scmp.ne.s32.totalorder %s70, %s72
      %p79 = scmp.eq.s32.totalorder %s20, 1
      %p80 = por %p78, %p79
      %p81 = scmp.ne.s32.totalorder %s72, %s73
      %p82 = scmp.eq.s32.totalorder %s20, 0
      %p83 = por %p81, %p82
      %p84 = scmp.ne.s32.totalorder %s72, %s73
      %p85 = scmp.eq.s32.totalorder %s21, 1
      %p86 = por %p84, %p85
      %p88 = scmp.ne.s32.totalorder %s73, %s87
      %p89 = scmp.eq.s32.totalorder %s21, 0
      %p90 = por %p88, %p89
      %s92 = sadd.s32 %s91, 1
      %p95 = scmp.eq.s32.totalorder %s15, 1
      %p96 = scmp.ne.s32.totalorder %s91, %s93
      %p97 = scmp.eq.s32.totalorder %s15, 0
      %p98 = por %p96, %p97
      %p99 = scmp.ne.s32.totalorder %s91, %s93
      %p100 = scmp.eq.s32.totalorder %s20, 1
      %p101 = por %p99, %p100
      %p102 = scmp.ne.s32.totalorder %s93, %s94
      %p103 = scmp.eq.s32.totalorder %s20, 0
      %p104 = por %p102, %p103
      %p105 = scmp.ne.s32.totalorder %s93, %s94
      %p106 = scmp.eq.s32.totalorder %s21, 1
      %p107 = por %p105, %p106
      %p109 = scmp.ne.s32.totalorder %s94, %s108
      %p110 = scmp.eq.s32.totalorder %s21, 0
      %p111 = por %p109, %p110
      %s113 = sadd.s32 %s112, 1
      %p116 = scmp.eq.s32.totalorder %s15, 1
      %p117 = scmp.ne.s32.totalorder %s112, %s114
      %p118 = scmp.eq.s32.totalorder %s15, 0
      %p119 = por %p117, %p118
      %p120 = scmp.ne.s32.totalorder %s112, %s114
      %p121 = scmp.eq.s32.totalorder %s20, 1
      %p122 = por %p120, %p121
      %p123 = scmp.ne.s32.totalorder %s114, %s115
      %p124 = scmp.eq.s32.totalorder %s20, 0
      %p125 = por %p123, %p124
      %p126 = scmp.ne.s32.totalorder %s114, %s115
      %p127 = scmp.eq.s32.totalorder %s21, 1
      %p128 = por %p126, %p127
      %p130 = scmp.ne.s32.totalorder %s115, %s129
      %p131 = scmp.eq.s32.totalorder %s21, 0
      %p132 = por %p130, %p131
      %s134 = sadd.s32 %s133, 1
      %p137 = scmp.eq.s32.totalorder %s15, 1
      %p138 = scmp.ne.s32.totalorder %s133, %s135
      %p139 = scmp.eq.s32.totalorder %s15, 0
      %p140 = por %p138, %p139
      %p141 = scmp.ne.s32.totalorder %s133, %s135
      %p142 = scmp.eq.s32.totalorder %s20, 1
      %p143 = por %p141, %p142
      %p144 = scmp.ne.s32.totalorder %s135, %s136
      %p145 = scmp.eq.s32.totalorder %s20, 0
      %p146 = por %p144, %p145
      %p147 = scmp.ne.s32.totalorder %s135, %s136
      %p148 = scmp.eq.s32.totalorder %s21, 1
      %p149 = por %p147, %p148
      %p151 = scmp.ne.s32.totalorder %s136, %s150
      %p152 = scmp.eq.s32.totalorder %s21, 0
      %p153 = por %p151, %p152
      %s154 = ssub.s32 %s15, %s22
      %p155 = scmp.eq.s32.totalorder %s154, 0
      %s157 = sadd.s32 %s156, 1
      %s158 = scalar_select %p155, %s156, %s157
      %p161 = pneg %p155
      %p162 = scmp.eq.s32.totalorder %s15, 1
      %p163 = por %p161, %p162
      %p164 = scmp.ne.s32.totalorder %s156, %s159
      %p165 = scmp.eq.s32.totalorder %s15, 0
      %p166 = por %p164, %p165
      %p167 = scmp.ne.s32.totalorder %s156, %s159
      %p168 = scmp.eq.s32.totalorder %s20, 1
      %p169 = por %p167, %p168
      %p170 = scmp.ne.s32.totalorder %s159, %s160
      %p171 = scmp.eq.s32.totalorder %s20, 0
      %p172 = por %p170, %p171
      %p173 = scmp.ne.s32.totalorder %s159, %s160
      %p174 = scmp.eq.s32.totalorder %s21, 1
      %p175 = por %p173, %p174
      %p177 = scmp.ne.s32.totalorder %s160, %s176
      %p178 = scmp.eq.s32.totalorder %s21, 0
      %p179 = por %p177, %p178
      %p180 = scmp.le.s32.totalorder 1, %s15
      %p181 = scmp.lt.s32.totalorder %s15, 3
      %p182 = pnand %p180, %p181
      %p183 = pneg %p182
      // Predicated region
      $region9: #{tpu_custom_call.1} parent=5 // pred_check
        _
      $region10: #{tpu_custom_call.1} parent=5 // pred_check_branch
        %185 = sbr.rel (%p182) target = $region12
      $region11: #{tpu_custom_call.1} parent=5 // pred_region
        %s186 = ssub.s32 %s15, 1
        // Predicated region
        $region13: #{tpu_custom_call.1} parent=11 // pred_check
          %p187 = pneg %p62
        $region14: #{tpu_custom_call.1} parent=11 // pred_check_branch
          %189 = sbr.rel (%p187) target = $region16
        $region15: #{tpu_custom_call.1} parent=11 // pred_region
          _
        $region16: #{tpu_custom_call.1} parent=11 // pred_fallthru
          _
        // Predicated region
        $region17: #{tpu_custom_call.1} parent=11 // pred_check
          %p190 = pneg %p83
        $region18: #{tpu_custom_call.1} parent=11 // pred_check_branch
          %192 = sbr.rel (%p190) target = $region20
        $region19: #{tpu_custom_call.1} parent=11 // pred_region
          _
        $region20: #{tpu_custom_call.1} parent=11 // pred_fallthru
          _
        // Predicated region
        $region21: #{tpu_custom_call.1} parent=11 // pred_check
          %p193 = pneg %p104
        $region22: #{tpu_custom_call.1} parent=11 // pred_check_branch
          %195 = sbr.rel (%p193) target = $region24
        $region23: #{tpu_custom_call.1} parent=11 // pred_region
          _
        $region24: #{tpu_custom_call.1} parent=11 // pred_fallthru
          _
        // Predicated region
        $region25: #{tpu_custom_call.1} parent=11 // pred_check
          %p196 = pneg %p125
        $region26: #{tpu_custom_call.1} parent=11 // pred_check_branch
          %198 = sbr.rel (%p196) target = $region28
        $region27: #{tpu_custom_call.1} parent=11 // pred_region
          _
        $region28: #{tpu_custom_call.1} parent=11 // pred_fallthru
          _
        // Predicated region
        $region29: #{tpu_custom_call.1} parent=11 // pred_check
          %p199 = pneg %p146
        $region30: #{tpu_custom_call.1} parent=11 // pred_check_branch
          %201 = sbr.rel (%p199) target = $region32
        $region31: #{tpu_custom_call.1} parent=11 // pred_region
          _
        $region32: #{tpu_custom_call.1} parent=11 // pred_fallthru
          _
      $region12: #{tpu_custom_call.1} parent=5 // pred_fallthru
        _
      %p202 = scmp.lt.s32.totalorder %s15, 2
      // Predicated region
      $region33: #{tpu_custom_call.1} parent=5 // pred_check
        %p203 = pneg %p202
      $region34: #{tpu_custom_call.1} parent=5 // pred_check_branch
        %205 = sbr.rel (%p203) target = $region36
      $region35: #{tpu_custom_call.1} parent=5 // pred_region
        // Predicated region
        $region37: #{tpu_custom_call.1} parent=35 // pred_check
          %p206 = pneg %p35
        $region38: #{tpu_custom_call.1} parent=35 // pred_check_branch
          %208 = sbr.rel (%p206) target = $region40
        $region39: #{tpu_custom_call.1} parent=35 // pred_region
          %s209 = sand.u32 %s25, 1
          %s210 = sand.u32 %s25, 1
          %s211 = smul.addr %s210, 96
          %s212 = scalar_lea.vmem [#allocation2], %s211
          %s213 = smul.u32 3, %s15
          %s214 = smul.addr %s213, 8
          %s215 = scalar_lea.vmem %s0, %s214
          // Predicated region
          $region41: #{tpu_custom_call.1} parent=39 // pred_check
            _
          $region42: #{tpu_custom_call.1} parent=39 // pred_check_branch
            %217 = sbr.rel (0) target = $region44
          $region43: #{tpu_custom_call.1} parent=39 // pred_region
            // Predicated region
            $region45: #{tpu_custom_call.1} parent=43 // pred_check
              _
            $region46: #{tpu_custom_call.1} parent=43 // pred_check_branch
              %219 = sbr.rel (0) target = $region48
            $region47: #{tpu_custom_call.1} parent=43 // pred_region
              loop: start=0, step=1, limit=1
              $region49: #{tpu_custom_call.1} parent=47 // loop_pre_header
                _
              $region50: #{tpu_custom_call.1} parent=47 // loop_header
                %s221 = sphi 0, %s225
                %p222 = scmp.ge.s32.totalorder %s221, 1
                %s226 = sphi %s215, %s215
                %s227 = sphi %s212, %s212
              $region51: #{tpu_custom_call.1} parent=47 // loop_header_branch
                %224 = sbr.rel (%p222) target = $region55
              $region52: #{tpu_custom_call.1} parent=47 // loop_body
                %v228 = vld [vmem:[%s226] sm:$0xff]
                %229 = vst [vmem:[%s227] sm:$0xff] %v228
                %v230 = vld [vmem:[%s226 + $0x8] sm:$0xff]
                %231 = vst [vmem:[%s227 + $0x8] sm:$0xff] %v230
                %v232 = vld [vmem:[%s226 + $0x10] sm:$0xff]
                %233 = vst [vmem:[%s227 + $0x10] sm:$0xff] %v232
                %v234 = vld [vmem:[%s226 + $0x30] sm:$0xff]
                %235 = vst [vmem:[%s227 + $0x18] sm:$0xff] %v234
                %v236 = vld [vmem:[%s226 + $0x38] sm:$0xff]
                %237 = vst [vmem:[%s227 + $0x20] sm:$0xff] %v236
                %v238 = vld [vmem:[%s226 + $0x40] sm:$0xff]
                %239 = vst [vmem:[%s227 + $0x28] sm:$0xff] %v238
                %v240 = vld [vmem:[%s226 + $0x60] sm:$0xff]
                %241 = vst [vmem:[%s227 + $0x30] sm:$0xff] %v240
                %v242 = vld [vmem:[%s226 + $0x68] sm:$0xff]
                %243 = vst [vmem:[%s227 + $0x38] sm:$0xff] %v242
                %v244 = vld [vmem:[%s226 + $0x70] sm:$0xff]
                %245 = vst [vmem:[%s227 + $0x40] sm:$0xff] %v244
                %v246 = vld [vmem:[%s226 + $0x90] sm:$0xff]
                %247 = vst [vmem:[%s227 + $0x48] sm:$0xff] %v246
                %v248 = vld [vmem:[%s226 + $0x98] sm:$0xff]
                %249 = vst [vmem:[%s227 + $0x50] sm:$0xff] %v248
                %v250 = vld [vmem:[%s226 + $0xa0] sm:$0xff]
                %251 = vst [vmem:[%s227 + $0x58] sm:$0xff] %v250
              $region53: #{tpu_custom_call.1} parent=47 // loop_footer
                %s225 = sadd.s32 1, %s221
              $region54: #{tpu_custom_call.1} parent=47 // loop_footer_branch
                %220 = sbr.rel target = $region50
              $region55: #{tpu_custom_call.1} parent=47 // loop_exit
                _
            $region48: #{tpu_custom_call.1} parent=43 // pred_fallthru
              _
            // Predicated region
            $region56: #{tpu_custom_call.1} parent=43 // pred_check
              _
            $region57: #{tpu_custom_call.1} parent=43 // pred_check_branch
              %253 = sbr.rel target = $region59
            $region58: #{tpu_custom_call.1} parent=43 // pred_region
              _
            $region59: #{tpu_custom_call.1} parent=43 // pred_fallthru
              _
          $region44: #{tpu_custom_call.1} parent=39 // pred_fallthru
            _
          %254 = vnop
        $region40: #{tpu_custom_call.1} parent=35 // pred_fallthru
          _
      $region36: #{tpu_custom_call.1} parent=5 // pred_fallthru
        _
      %p255 = scmp.le.s32.totalorder 1, %s15
      %p256 = scmp.lt.s32.totalorder %s15, 3
      %p257 = pnand %p255, %p256
      %p258 = pneg %p257
      // Predicated region
      $region60: #{tpu_custom_call.1} parent=5 // pred_check
        _
      $region61: #{tpu_custom_call.1} parent=5 // pred_check_branch
        %260 = sbr.rel (%p257) target = $region63
      $region62: #{tpu_custom_call.1} parent=5 // pred_region
        %s261 = ssub.s32 %s15, 1
        %s262 = sand.u32 %s28, 1
        %s263 = sand.u32 %s28, 1
        %s264 = smul.addr %s263, 96
        %s265 = scalar_lea.vmem [#allocation2], %s264
        // Predicated region
        $region64: #{tpu_custom_call.1} parent=62 // pred_check
          %p266 = pneg %p41
        $region65: #{tpu_custom_call.1} parent=62 // pred_check_branch
          %268 = sbr.rel (%p266) target = $region67
        $region66: #{tpu_custom_call.1} parent=62 // pred_region
          _
        $region67: #{tpu_custom_call.1} parent=62 // pred_fallthru
          _
        %s269 = sand.u32 %s28, 1
        %s270 = sand.u32 %s28, 1
        %s271 = smul.addr %s270, 96
        %s272 = scalar_lea.vmem [#allocation2], %s271
        %p273 = pneg %p41
        %p274 = pneg %p38
        %p275 = pneg %p62
        %p276 = pneg %p59
        %p277 = pneg %p83
        %p278 = pneg %p80
        %p279 = pneg %p104
        %p280 = pneg %p101
        %p281 = pneg %p125
        %p282 = pneg %p122
        %p283 = pneg %p146
        %p284 = pneg %p143
        %p285 = pneg %p172
        %p286 = pneg %p169
        %s287 = sand.u32 %s159, 1
        %s288 = scalar_lea.sflag [#allocation4], %s287
        %s289 = sand.u32 %s159, 1
        %s290 = smul.addr %s289, 96
        %s291 = scalar_lea.vmem [#allocation3], %s290
        %s292 = smul.u32 3, %s20
        %s293 = smul.u32 3, %s20
        %v294 = vld [vmem:[%s265] sm:$0xff]
        %v295 = vld [vmem:[%s265 + $0x8] sm:$0xff]
        %v296 = vld [vmem:[%s265 + $0x10] sm:$0xff]
        %v297 = vld [vmem:[%s265 + $0x18] sm:$0xff]
        %v298 = vld [vmem:[%s265 + $0x20] sm:$0xff]
        %v299 = vld [vmem:[%s265 + $0x28] sm:$0xff]
        %v300 = vld [vmem:[%s265 + $0x30] sm:$0xff]
        %v301 = vld [vmem:[%s265 + $0x38] sm:$0xff]
        %v302 = vld [vmem:[%s265 + $0x40] sm:$0xff]
        %v303 = vld [vmem:[%s265 + $0x48] sm:$0xff]
        %v304 = vld [vmem:[%s265 + $0x50] sm:$0xff]
        %v305 = vld [vmem:[%s265 + $0x58] sm:$0xff]
        %v306 = vld [vmem:[%s1] sm:$0xff]
        %v307 = vld [vmem:[%s1 + $0x8] sm:$0xff]
        %v308 = vld [vmem:[%s1 + $0x10] sm:$0xff]
        %v309 = vld [vmem:[%s1 + $0x18] sm:$0xff]
        %vm310 = vcmask 261120
        %v312 = vsel %vm310, %v306, 0
        %v315 = vsel %vm310, %v307, 0
        %v318 = vsel %vm310, %v308, 0
        %v321 = vsel %vm310, %v309, 0
        %323 = vmatprep.subr.mxu0 %v295
        %324 = vmatpush1.msra.mxu0 %v294
        %325 = vmatprep.subr.mxu0 %v298
        %326 = vmatpush1.msra.mxu0 %v297
        %327 = vmatprep.subr.mxu0 %v301
        %328 = vmatpush1.msra.mxu0 %v300
        %329 = vmatprep.subr.mxu0 %v304
        %330 = vmatpush1.msra.mxu0 %v303
        %331 = vmatprep.subr.mxu0 0.0
        %332 = vmatpush1.msra.mxu0 0.0
        %333 = vmatprep.subr.mxu0 0.0
        %334 = vmatpush1.msra.mxu0 0.0
        %335 = vmatprep.subr.mxu0 0.0
        %336 = vmatpush1.msra.mxu0 0.0
        %337 = vmatprep.subr.mxu0 0.0
        %338 = vmatpush1.msra.mxu0 0.0
        %339 = vmatprep.subr.mxu0 0.0
        %340 = vmatpush1.msra.mxu0 0.0
        %341 = vmatprep.subr.mxu0 0.0
        %342 = vmatpush1.msra.mxu0 0.0
        %343 = vmatprep.subr.mxu0 0.0
        %344 = vmatpush1.msra.mxu0 0.0
        %345 = vmatprep.subr.mxu0 0.0
        %346 = vmatpush1.msra.mxu0 0.0
        %347 = vmatprep.subr.mxu0 0.0
        %348 = vmatpush1.msra.mxu0 0.0
        %349 = vmatprep.subr.mxu0 0.0
        %350 = vmatpush1.msra.mxu0 0.0
        %351 = vmatprep.subr.mxu0 0.0
        %352 = vmatpush1.msra.mxu0 0.0
        %353 = vmatprep.subr.mxu0 0.0
        %354 = vmatpush1.msra.mxu0 0.0
        %355 = vmatprep.subr.mxu0 0.0
        %356 = vmatpush1.msra.mxu0 0.0
        %357 = vmatprep.subr.mxu0 0.0
        %358 = vmatpush1.msra.mxu0 0.0
        %359 = vmatprep.subr.mxu0 0.0
        %360 = vmatpush1.msra.mxu0 0.0
        %361 = vmatprep.subr.mxu0 0.0
        %362 = vmatpush1.msra.mxu0 0.0
        %363 = vmatprep.subr.mxu0 0.0
        %364 = vmatpush1.msra.mxu0 0.0
        %365 = vmatprep.subr.mxu0 0.0
        %366 = vmatpush1.msra.mxu0 0.0
        %367 = vmatprep.subr.mxu0 0.0
        %368 = vmatpush1.msra.mxu0 0.0
        %369 = vmatprep.subr.mxu0 0.0
        %370 = vmatpush1.msra.mxu0 0.0
        %371 = vmatprep.subr.mxu0 0.0
        %372 = vmatpush1.msra.mxu0 0.0
        %373 = vmatprep.subr.mxu0 0.0
        %374 = vmatpush1.msra.mxu0 0.0
        %375 = vmatprep.subr.mxu0 0.0
        %376 = vmatpush1.msra.mxu0 0.0
        %377 = vmatprep.subr.mxu0 0.0
        %378 = vmatpush1.msra.mxu0 0.0
        %379 = vmatprep.subr.mxu0 0.0
        %380 = vmatpush1.msra.mxu0 0.0
        %381 = vmatprep.subr.mxu0 0.0
        %382 = vmatpush1.msra.mxu0 0.0
        %383 = vmatprep.subr.mxu0 0.0
        %384 = vmatpush1.msra.mxu0 0.0
        %385 = vmatprep.subr.mxu0 0.0
        %386 = vmatpush1.msra.mxu0 0.0
        %387 = vmatprep.mubr.f32.mxu0 0.0
        %388 = vmatmul.mubr.f32.gmra.mrb[0].mxu0 %v312
        %v389 = vpop.f32.mrb[0].mxu0
        %v390 = vadd.f32 0.0, %v389
        %v391 = vpop.f32.mrb[0].mxu0
        %v392 = vadd.f32 0.0, %v391
        %393 = vmatprep.mubr.f32.mxu0 0.0
        %394 = vmatmul.mubr.f32.gmra.mrb[0].mxu0 %v315
        %v395 = vpop.f32.mrb[0].mxu0
        %v396 = vadd.f32 0.0, %v395
        %v397 = vpop.f32.mrb[0].mxu0
        %v398 = vadd.f32 0.0, %v397
        %399 = vmatprep.mubr.f32.mxu0 0.0
        %400 = vmatmul.mubr.f32.gmra.mrb[0].mxu0 %v318
        %v401 = vpop.f32.mrb[0].mxu0
        %v402 = vadd.f32 0.0, %v401
        %v403 = vpop.f32.mrb[0].mxu0
        %v404 = vadd.f32 0.0, %v403
        %405 = vmatprep.mubr.f32.mxu0 0.0
        %406 = vmatmul.mubr.f32.gmra.mrb[0].mxu0 %v321
        %v407 = vpop.f32.mrb[0].mxu0
        %v408 = vadd.f32 0.0, %v407
        %v409 = vpop.f32.mrb[0].mxu0
        %v410 = vadd.f32 0.0, %v409
        %411 = vdwg.mxu0
        %412 = vmatprep.subr.mxu0 0.0
        %413 = vmatpush1.msra.mxu0 %v296
        %414 = vmatprep.subr.mxu0 0.0
        %415 = vmatpush1.msra.mxu0 %v299
        %416 = vmatprep.subr.mxu0 0.0
        %417 = vmatpush1.msra.mxu0 %v302
        %418 = vmatprep.subr.mxu0 0.0
        %419 = vmatpush1.msra.mxu0 %v305
        %420 = vmatprep.subr.mxu0 0.0
        %421 = vmatpush1.msra.mxu0 0.0
        %422 = vmatprep.subr.mxu0 0.0
        %423 = vmatpush1.msra.mxu0 0.0
        %424 = vmatprep.subr.mxu0 0.0
        %425 = vmatpush1.msra.mxu0 0.0
        %426 = vmatprep.subr.mxu0 0.0
        %427 = vmatpush1.msra.mxu0 0.0
        %428 = vmatprep.subr.mxu0 0.0
        %429 = vmatpush1.msra.mxu0 0.0
        %430 = vmatprep.subr.mxu0 0.0
        %431 = vmatpush1.msra.mxu0 0.0
        %432 = vmatprep.subr.mxu0 0.0
        %433 = vmatpush1.msra.mxu0 0.0
        %434 = vmatprep.subr.mxu0 0.0
        %435 = vmatpush1.msra.mxu0 0.0
        %436 = vmatprep.subr.mxu0 0.0
        %437 = vmatpush1.msra.mxu0 0.0
        %438 = vmatprep.subr.mxu0 0.0
        %439 = vmatpush1.msra.mxu0 0.0
        %440 = vmatprep.subr.mxu0 0.0
        %441 = vmatpush1.msra.mxu0 0.0
        %442 = vmatprep.subr.mxu0 0.0
        %443 = vmatpush1.msra.mxu0 0.0
        %444 = vmatprep.subr.mxu0 0.0
        %445 = vmatpush1.msra.mxu0 0.0
        %446 = vmatprep.subr.mxu0 0.0
        %447 = vmatpush1.msra.mxu0 0.0
        %448 = vmatprep.subr.mxu0 0.0
        %449 = vmatpush1.msra.mxu0 0.0
        %450 = vmatprep.subr.mxu0 0.0
        %451 = vmatpush1.msra.mxu0 0.0
        %452 = vmatprep.subr.mxu0 0.0
        %453 = vmatpush1.msra.mxu0 0.0
        %454 = vmatprep.subr.mxu0 0.0
        %455 = vmatpush1.msra.mxu0 0.0
        %456 = vmatprep.subr.mxu0 0.0
        %457 = vmatpush1.msra.mxu0 0.0
        %458 = vmatprep.subr.mxu0 0.0
        %459 = vmatpush1.msra.mxu0 0.0
        %460 = vmatprep.subr.mxu0 0.0
        %461 = vmatpush1.msra.mxu0 0.0
        %462 = vmatprep.subr.mxu0 0.0
        %463 = vmatpush1.msra.mxu0 0.0
        %464 = vmatprep.subr.mxu0 0.0
        %465 = vmatpush1.msra.mxu0 0.0
        %466 = vmatprep.subr.mxu0 0.0
        %467 = vmatpush1.msra.mxu0 0.0
        %468 = vmatprep.subr.mxu0 0.0
        %469 = vmatpush1.msra.mxu0 0.0
        %470 = vmatprep.subr.mxu0 0.0
        %471 = vmatpush1.msra.mxu0 0.0
        %472 = vmatprep.subr.mxu0 0.0
        %473 = vmatpush1.msra.mxu0 0.0
        %474 = vmatprep.subr.mxu0 0.0
        %475 = vmatpush1.msra.mxu0 0.0
        %476 = vmatprep.mubr.f32.mxu0 0.0
        %477 = vmatmul.mubr.f32.gmra.mrb[0].mxu0 %v312
        %v478 = vpop.f32.mrb[0].mxu0
        %v479 = vadd.f32 0.0, %v478
        %v480 = vpop.f32.mrb[0].mxu0
        %481 = vmatprep.mubr.f32.mxu0 0.0
        %482 = vmatmul.mubr.f32.gmra.mrb[0].mxu0 %v315
        %v483 = vpop.f32.mrb[0].mxu0
        %v484 = vadd.f32 0.0, %v483
        %v485 = vpop.f32.mrb[0].mxu0
        %486 = vmatprep.mubr.f32.mxu0 0.0
        %487 = vmatmul.mubr.f32.gmra.mrb[0].mxu0 %v318
        %v488 = vpop.f32.mrb[0].mxu0
        %v489 = vadd.f32 0.0, %v488
        %v490 = vpop.f32.mrb[0].mxu0
        %491 = vmatprep.mubr.f32.mxu0 0.0
        %492 = vmatmul.mubr.f32.gmra.mrb[0].mxu0 %v321
        %v493 = vpop.f32.mrb[0].mxu0
        %v494 = vadd.f32 0.0, %v493
        %v495 = vpop.f32.mrb[0].mxu0
        %496 = vdwg.mxu0
        %v497 = vmul.f32 %v390, %v390
        %v498 = vmul.f32 %v392, %v392
        %v499 = vmul.f32 %v479, %v479
        %v500 = vmul.f32 %v396, %v396
        %v501 = vmul.f32 %v398, %v398
        %v502 = vmul.f32 %v484, %v484
        %v503 = vmul.f32 %v402, %v402
        %v504 = vmul.f32 %v404, %v404
        %v505 = vmul.f32 %v489, %v489
        %v506 = vmul.f32 %v408, %v408
        %v507 = vmul.f32 %v410, %v410
        %v508 = vmul.f32 %v494, %v494
        %v509 = vld [vmem:[%s4] sm:$0xff]
        %v510 = vld [vmem:[%s4 + $0x8] sm:$0xff]
        %v511 = vld [vmem:[%s4 + $0x10] sm:$0xff]
        %v512 = vld [vmem:[%s4 + $0x18] sm:$0xff]
        %v513 = vld [vmem:[%s4 + $0x20] sm:$0xff]
        %v514 = vld [vmem:[%s4 + $0x28] sm:$0xff]
        %v515 = vld [vmem:[%s4 + $0x30] sm:$0xff]
        %v516 = vld [vmem:[%s4 + $0x38] sm:$0xff]
        %v517 = vld [vmem:[%s4 + $0x40] sm:$0xff]
        %v518 = vld [vmem:[%s4 + $0x48] sm:$0xff]
        %v519 = vld [vmem:[%s4 + $0x50] sm:$0xff]
        %v520 = vld [vmem:[%s4 + $0x58] sm:$0xff]
        %v521 = vld [vmem:[%s4 + $0x60] sm:$0xff]
        %v522 = vld [vmem:[%s4 + $0x68] sm:$0xff]
        %v523 = vld [vmem:[%s4 + $0x70] sm:$0xff]
        %v524 = vld [vmem:[%s4 + $0x78] sm:$0xff]
        %v525 = vld [vmem:[%s4 + $0x80] sm:$0xff]
        %v526 = vld [vmem:[%s4 + $0x88] sm:$0xff]
        %v527 = vld [vmem:[%s4 + $0x90] sm:$0xff]
        %v528 = vld [vmem:[%s4 + $0x98] sm:$0xff]
        %v529 = vld [vmem:[%s4 + $0xa0] sm:$0xff]
        %v530 = vld [vmem:[%s4 + $0xa8] sm:$0xff]
        %v531 = vld [vmem:[%s4 + $0xb0] sm:$0xff]
        %v532 = vld [vmem:[%s4 + $0xb8] sm:$0xff]
        %v533 = vld [vmem:[%s4 + $0xc0] sm:$0xff]
        %v534 = vld [vmem:[%s4 + $0xc8] sm:$0xff]
        %v535 = vld [vmem:[%s4 + $0xd0] sm:$0xff]
        %v536 = vld [vmem:[%s4 + $0xd8] sm:$0xff]
        %v537 = vld [vmem:[%s4 + $0xe0] sm:$0xff]
        %v538 = vld [vmem:[%s4 + $0xe8] sm:$0xff]
        %v539 = vld [vmem:[%s4 + $0xf0] sm:$0xff]
        %v540 = vld [vmem:[%s4 + $0xf8] sm:$0xff]
        %v541 = vld [vmem:[%s4 + $0x100] sm:$0xff]
        %v542 = vld [vmem:[%s4 + $0x108] sm:$0xff]
        %v543 = vld [vmem:[%s4 + $0x110] sm:$0xff]
        %v544 = vld [vmem:[%s4 + $0x118] sm:$0xff]
        %v545 = vld [vmem:[%s4 + $0x120] sm:$0xff]
        %v546 = vld [vmem:[%s4 + $0x128] sm:$0xff]
        %v547 = vld [vmem:[%s4 + $0x130] sm:$0xff]
        %v548 = vld [vmem:[%s4 + $0x138] sm:$0xff]
        %v549 = vld [vmem:[%s4 + $0x140] sm:$0xff]
        %v550 = vld [vmem:[%s4 + $0x148] sm:$0xff]
        %v551 = vld [vmem:[%s4 + $0x150] sm:$0xff]
        %v552 = vld [vmem:[%s4 + $0x158] sm:$0xff]
        %v553 = vld [vmem:[%s4 + $0x160] sm:$0xff]
        %v554 = vld [vmem:[%s4 + $0x168] sm:$0xff]
        %v555 = vld [vmem:[%s4 + $0x170] sm:$0xff]
        %v556 = vld [vmem:[%s4 + $0x178] sm:$0xff]
        %557 = vmatprep.subr.mxu0 0.0
        %558 = vmatpush1.msra.mxu0 %v509
        %559 = vmatprep.subr.mxu0 0.0
        %560 = vmatpush1.msra.mxu0 %v510
        %561 = vmatprep.subr.mxu0 0.0
        %562 = vmatpush1.msra.mxu0 %v511
        %563 = vmatprep.subr.mxu0 0.0
        %564 = vmatpush1.msra.mxu0 %v512
        %565 = vmatprep.subr.mxu0 0.0
        %566 = vmatpush1.msra.mxu0 %v513
        %567 = vmatprep.subr.mxu0 0.0
        %568 = vmatpush1.msra.mxu0 %v514
        %569 = vmatprep.subr.mxu0 0.0
        %570 = vmatpush1.msra.mxu0 %v515
        %571 = vmatprep.subr.mxu0 0.0
        %572 = vmatpush1.msra.mxu0 %v516
        %573 = vmatprep.subr.mxu0 0.0
        %574 = vmatpush1.msra.mxu0 %v517
        %575 = vmatprep.subr.mxu0 0.0
        %576 = vmatpush1.msra.mxu0 %v518
        %577 = vmatprep.subr.mxu0 0.0
        %578 = vmatpush1.msra.mxu0 %v519
        %579 = vmatprep.subr.mxu0 0.0
        %580 = vmatpush1.msra.mxu0 %v520
        %581 = vmatprep.subr.mxu0 0.0
        %582 = vmatpush1.msra.mxu0 %v521
        %583 = vmatprep.subr.mxu0 0.0
        %584 = vmatpush1.msra.mxu0 %v522
        %585 = vmatprep.subr.mxu0 0.0
        %586 = vmatpush1.msra.mxu0 %v523
        %587 = vmatprep.subr.mxu0 0.0
        %588 = vmatpush1.msra.mxu0 %v524
        %589 = vmatprep.subr.mxu0 0.0
        %590 = vmatpush1.msra.mxu0 %v525
        %591 = vmatprep.subr.mxu0 0.0
        %592 = vmatpush1.msra.mxu0 %v526
        %593 = vmatprep.subr.mxu0 0.0
        %594 = vmatpush1.msra.mxu0 %v527
        %595 = vmatprep.subr.mxu0 0.0
        %596 = vmatpush1.msra.mxu0 %v528
        %597 = vmatprep.subr.mxu0 0.0
        %598 = vmatpush1.msra.mxu0 %v529
        %599 = vmatprep.subr.mxu0 0.0
        %600 = vmatpush1.msra.mxu0 %v530
        %601 = vmatprep.subr.mxu0 0.0
        %602 = vmatpush1.msra.mxu0 %v531
        %603 = vmatprep.subr.mxu0 0.0
        %604 = vmatpush1.msra.mxu0 %v532
        %605 = vmatprep.subr.mxu0 0.0
        %606 = vmatpush1.msra.mxu0 %v533
        %607 = vmatprep.subr.mxu0 0.0
        %608 = vmatpush1.msra.mxu0 %v534
        %609 = vmatprep.subr.mxu0 0.0
        %610 = vmatpush1.msra.mxu0 %v535
        %611 = vmatprep.subr.mxu0 0.0
        %612 = vmatpush1.msra.mxu0 %v536
        %613 = vmatprep.subr.mxu0 0.0
        %614 = vmatpush1.msra.mxu0 %v537
        %615 = vmatprep.subr.mxu0 0.0
        %616 = vmatpush1.msra.mxu0 %v538
        %617 = vmatprep.subr.mxu0 0.0
        %618 = vmatpush1.msra.mxu0 %v539
        %619 = vmatprep.subr.mxu0 0.0
        %620 = vmatpush1.msra.mxu0 %v540
        %621 = vmatprep.mubr.f32.mxu0 %v392
        %622 = vmatmul.mubr.f32.gmra.mrb[0].mxu0 %v390
        %v623 = vpop.f32.mrb[0].mxu0
        %v624 = vadd.f32 0.0, %v623
        %v625 = vpop.f32.mrb[0].mxu0
        %626 = vmatprep.mubr.f32.mxu0 %v398
        %627 = vmatmul.mubr.f32.gmra.mrb[0].mxu0 %v396
        %v628 = vpop.f32.mrb[0].mxu0
        %v629 = vadd.f32 0.0, %v628
        %v630 = vpop.f32.mrb[0].mxu0
        %631 = vmatprep.mubr.f32.mxu0 %v404
        %632 = vmatmul.mubr.f32.gmra.mrb[0].mxu0 %v402
        %v633 = vpop.f32.mrb[0].mxu0
        %v634 = vadd.f32 0.0, %v633
        %v635 = vpop.f32.mrb[0].mxu0
        %636 = vmatprep.mubr.f32.mxu0 %v410
        %637 = vmatmul.mubr.f32.gmra.mrb[0].mxu0 %v408
        %v638 = vpop.f32.mrb[0].mxu0
        %v639 = vadd.f32 0.0, %v638
        %v640 = vpop.f32.mrb[0].mxu0
        %641 = vmatprep.mubr.f32.mxu0 %v498
        %642 = vmatmul.mubr.f32.gmra.mrb[0].mxu0 %v497
        %v643 = vpop.f32.mrb[0].mxu0
        %v644 = vadd.f32 0.0, %v643
        %v645 = vpop.f32.mrb[0].mxu0
        %646 = vmatprep.mubr.f32.mxu0 %v501
        %647 = vmatmul.mubr.f32.gmra.mrb[0].mxu0 %v500
        %v648 = vpop.f32.mrb[0].mxu0
        %v649 = vadd.f32 0.0, %v648
        %v650 = vpop.f32.mrb[0].mxu0
        %651 = vmatprep.mubr.f32.mxu0 %v504
        %652 = vmatmul.mubr.f32.gmra.mrb[0].mxu0 %v503
        %v653 = vpop.f32.mrb[0].mxu0
        %v654 = vadd.f32 0.0, %v653
        %v655 = vpop.f32.mrb[0].mxu0
        %656 = vmatprep.mubr.f32.mxu0 %v507
        %657 = vmatmul.mubr.f32.gmra.mrb[0].mxu0 %v506
        %v658 = vpop.f32.mrb[0].mxu0
        %v659 = vadd.f32 0.0, %v658
        %v660 = vpop.f32.mrb[0].mxu0
        %661 = vdwg.mxu0
        %662 = vmatprep.subr.mxu0 0.0
        %663 = vmatpush1.msra.mxu0 %v541
        %664 = vmatprep.subr.mxu0 0.0
        %665 = vmatpush1.msra.mxu0 %v542
        %666 = vmatprep.subr.mxu0 0.0
        %667 = vmatpush1.msra.mxu0 %v543
        %668 = vmatprep.subr.mxu0 0.0
        %669 = vmatpush1.msra.mxu0 %v544
        %670 = vmatprep.subr.mxu0 0.0
        %671 = vmatpush1.msra.mxu0 %v545
        %672 = vmatprep.subr.mxu0 0.0
        %673 = vmatpush1.msra.mxu0 %v546
        %674 = vmatprep.subr.mxu0 0.0
        %675 = vmatpush1.msra.mxu0 %v547
        %676 = vmatprep.subr.mxu0 0.0
        %677 = vmatpush1.msra.mxu0 %v548
        %678 = vmatprep.subr.mxu0 0.0
        %679 = vmatpush1.msra.mxu0 %v549
        %680 = vmatprep.subr.mxu0 0.0
        %681 = vmatpush1.msra.mxu0 %v550
        %682 = vmatprep.subr.mxu0 0.0
        %683 = vmatpush1.msra.mxu0 %v551
        %684 = vmatprep.subr.mxu0 0.0
        %685 = vmatpush1.msra.mxu0 %v552
        %686 = vmatprep.subr.mxu0 0.0
        %687 = vmatpush1.msra.mxu0 %v553
        %688 = vmatprep.subr.mxu0 0.0
        %689 = vmatpush1.msra.mxu0 %v554
        %690 = vmatprep.subr.mxu0 0.0
        %691 = vmatpush1.msra.mxu0 %v555
        %692 = vmatprep.subr.mxu0 0.0
        %693 = vmatpush1.msra.mxu0 %v556
        %694 = vmatprep.subr.mxu0 0.0
        %695 = vmatpush1.msra.mxu0 0.0
        %696 = vmatprep.subr.mxu0 0.0
        %697 = vmatpush1.msra.mxu0 0.0
        %698 = vmatprep.subr.mxu0 0.0
        %699 = vmatpush1.msra.mxu0 0.0
        %700 = vmatprep.subr.mxu0 0.0
        %701 = vmatpush1.msra.mxu0 0.0
        %702 = vmatprep.subr.mxu0 0.0
        %703 = vmatpush1.msra.mxu0 0.0
        %704 = vmatprep.subr.mxu0 0.0
        %705 = vmatpush1.msra.mxu0 0.0
        %706 = vmatprep.subr.mxu0 0.0
        %707 = vmatpush1.msra.mxu0 0.0
        %708 = vmatprep.subr.mxu0 0.0
        %709 = vmatpush1.msra.mxu0 0.0
        %710 = vmatprep.subr.mxu0 0.0
        %711 = vmatpush1.msra.mxu0 0.0
        %712 = vmatprep.subr.mxu0 0.0
        %713 = vmatpush1.msra.mxu0 0.0
        %714 = vmatprep.subr.mxu0 0.0
        %715 = vmatpush1.msra.mxu0 0.0
        %716 = vmatprep.subr.mxu0 0.0
        %717 = vmatpush1.msra.mxu0 0.0
        %718 = vmatprep.subr.mxu0 0.0
        %719 = vmatpush1.msra.mxu0 0.0
        %720 = vmatprep.subr.mxu0 0.0
        %721 = vmatpush1.msra.mxu0 0.0
        %722 = vmatprep.subr.mxu0 0.0
        %723 = vmatpush1.msra.mxu0 0.0
        %724 = vmatprep.subr.mxu0 0.0
        %725 = vmatpush1.msra.mxu0 0.0
        %726 = vmatprep.mubr.f32.mxu0 0.0
        %727 = vmatmul.mubr.f32.gmra.mrb[0].mxu0 %v479
        %v728 = vpop.f32.mrb[0].mxu0
        %v729 = vadd.f32 %v624, %v728
        %v730 = vpop.f32.mrb[0].mxu0
        %731 = vmatprep.mubr.f32.mxu0 0.0
        %732 = vmatmul.mubr.f32.gmra.mrb[0].mxu0 %v484
        %v733 = vpop.f32.mrb[0].mxu0
        %v734 = vadd.f32 %v629, %v733
        %v735 = vpop.f32.mrb[0].mxu0
        %736 = vmatprep.mubr.f32.mxu0 0.0
        %737 = vmatmul.mubr.f32.gmra.mrb[0].mxu0 %v489
        %v738 = vpop.f32.mrb[0].mxu0
        %v739 = vadd.f32 %v634, %v738
        %v740 = vpop.f32.mrb[0].mxu0
        %741 = vmatprep.mubr.f32.mxu0 0.0
        %742 = vmatmul.mubr.f32.gmra.mrb[0].mxu0 %v494
        %v743 = vpop.f32.mrb[0].mxu0
        %v744 = vadd.f32 %v639, %v743
        %v745 = vpop.f32.mrb[0].mxu0
        %746 = vmatprep.mubr.f32.mxu0 0.0
        %747 = vmatmul.mubr.f32.gmra.mrb[0].mxu0 %v499
        %v748 = vpop.f32.mrb[0].mxu0
        %v749 = vadd.f32 %v644, %v748
        %v750 = vpop.f32.mrb[0].mxu0
        %751 = vmatprep.mubr.f32.mxu0 0.0
        %752 = vmatmul.mubr.f32.gmra.mrb[0].mxu0 %v502
        %v753 = vpop.f32.mrb[0].mxu0
        %v754 = vadd.f32 %v649, %v753
        %v755 = vpop.f32.mrb[0].mxu0
        %756 = vmatprep.mubr.f32.mxu0 0.0
        %757 = vmatmul.mubr.f32.gmra.mrb[0].mxu0 %v505
        %v758 = vpop.f32.mrb[0].mxu0
        %v759 = vadd.f32 %v654, %v758
        %v760 = vpop.f32.mrb[0].mxu0
        %761 = vmatprep.mubr.f32.mxu0 0.0
        %762 = vmatmul.mubr.f32.gmra.mrb[0].mxu0 %v508
        %v763 = vpop.f32.mrb[0].mxu0
        %v764 = vadd.f32 %v659, %v763
        %v765 = vpop.f32.mrb[0].mxu0
        %766 = vdwg.mxu0
        %v767 = vmul.f32 %v729, 0.020833334
        %v768 = vmul.f32 %v734, 0.020833334
        %v769 = vmul.f32 %v739, 0.020833334
        %v770 = vmul.f32 %v744, 0.020833334
        %v771 = vmul.f32 %v749, 0.020833334
        %v772 = vmul.f32 %v754, 0.020833334
        %v773 = vmul.f32 %v759, 0.020833334
        %v774 = vmul.f32 %v764, 0.020833334
        %v775 = vmul.f32 %v767, %v767
        %v776 = vmul.f32 %v768, %v768
        %v777 = vmul.f32 %v769, %v769
        %v778 = vmul.f32 %v770, %v770
        %v779 = vsub.f32 %v771, %v775
        %v780 = vsub.f32 %v772, %v776
        %v781 = vsub.f32 %v773, %v777
        %v782 = vsub.f32 %v774, %v778
        %v783 = vmax.f32 %v779, 0.0
        %v784 = vmax.f32 %v780, 0.0
        %v785 = vmax.f32 %v781, 0.0
        %v786 = vmax.f32 %v782, 0.0
        %v787 = vadd.f32 %v783, 1e-05
        %v788 = vadd.f32 %v784, 1e-05
        %v789 = vadd.f32 %v785, 1e-05
        %v790 = vadd.f32 %v786, 1e-05
        %v791 = vrsqrt.pop %v787
        %v792 = vrsqrt.pop %v788
        %v793 = vrsqrt.pop %v789
        %v794 = vrsqrt.pop %v790
        %v795 = vsub.f32 0.0, %v767
        %v796 = vsub.f32 0.0, %v768
        %v797 = vsub.f32 0.0, %v769
        %v798 = vsub.f32 0.0, %v770
        %v799 = vmul.f32 %v795, %v791
        %v800 = vmul.f32 %v796, %v792
        %v801 = vmul.f32 %v797, %v793
        %v802 = vmul.f32 %v798, %v794
        %v803 = vld [vmem:[%s5] sm:$0xff]
        %v804 = vld [vmem:[%s5 + $0x8] sm:$0xff]
        %v805 = vld [vmem:[%s5 + $0x10] sm:$0xff]
        %vm806 = vcmask 64512
        %v808 = vsel %vm806, %v791, 0
        %v811 = vsel %vm806, %v792, 0
        %v814 = vsel %vm806, %v793, 0
        %v817 = vsel %vm806, %v794, 0
        %v820 = vsel %vm806, %v799, 0
        %v823 = vsel %vm806, %v800, 0
        %v826 = vsel %vm806, %v801, 0
        %v829 = vsel %vm806, %v802, 0
        %831 = vmatprep.subr.mxu0 %v804
        %832 = vmatpush1.msra.mxu0 %v803
        %833 = vmatprep.subr.mxu0 0.0
        %834 = vmatpush1.msra.mxu0 0.0
        %835 = vmatprep.subr.mxu0 0.0
        %836 = vmatpush1.msra.mxu0 0.0
        %837 = vmatprep.subr.mxu0 0.0
        %838 = vmatpush1.msra.mxu0 0.0
        %839 = vmatprep.subr.mxu0 0.0
        %840 = vmatpush1.msra.mxu0 0.0
        %841 = vmatprep.subr.mxu0 0.0
        %842 = vmatpush1.msra.mxu0 0.0
        %843 = vmatprep.subr.mxu0 0.0
        %844 = vmatpush1.msra.mxu0 0.0
        %845 = vmatprep.subr.mxu0 0.0
        %846 = vmatpush1.msra.mxu0 0.0
        %847 = vmatprep.subr.mxu0 0.0
        %848 = vmatpush1.msra.mxu0 0.0
        %849 = vmatprep.subr.mxu0 0.0
        %850 = vmatpush1.msra.mxu0 0.0
        %851 = vmatprep.subr.mxu0 0.0
        %852 = vmatpush1.msra.mxu0 0.0
        %853 = vmatprep.subr.mxu0 0.0
        %854 = vmatpush1.msra.mxu0 0.0
        %855 = vmatprep.subr.mxu0 0.0
        %856 = vmatpush1.msra.mxu0 0.0
        %857 = vmatprep.subr.mxu0 0.0
        %858 = vmatpush1.msra.mxu0 0.0
        %859 = vmatprep.subr.mxu0 0.0
        %860 = vmatpush1.msra.mxu0 0.0
        %861 = vmatprep.subr.mxu0 0.0
        %862 = vmatpush1.msra.mxu0 0.0
        %863 = vmatprep.subr.mxu0 0.0
        %864 = vmatpush1.msra.mxu0 0.0
        %865 = vmatprep.subr.mxu0 0.0
        %866 = vmatpush1.msra.mxu0 0.0
        %867 = vmatprep.subr.mxu0 0.0
        %868 = vmatpush1.msra.mxu0 0.0
        %869 = vmatprep.subr.mxu0 0.0
        %870 = vmatpush1.msra.mxu0 0.0
        %871 = vmatprep.subr.mxu0 0.0
        %872 = vmatpush1.msra.mxu0 0.0
        %873 = vmatprep.subr.mxu0 0.0
        %874 = vmatpush1.msra.mxu0 0.0
        %875 = vmatprep.subr.mxu0 0.0
        %876 = vmatpush1.msra.mxu0 0.0
        %877 = vmatprep.subr.mxu0 0.0
        %878 = vmatpush1.msra.mxu0 0.0
        %879 = vmatprep.subr.mxu0 0.0
        %880 = vmatpush1.msra.mxu0 0.0
        %881 = vmatprep.subr.mxu0 0.0
        %882 = vmatpush1.msra.mxu0 0.0
        %883 = vmatprep.subr.mxu0 0.0
        %884 = vmatpush1.msra.mxu0 0.0
        %885 = vmatprep.subr.mxu0 0.0
        %886 = vmatpush1.msra.mxu0 0.0
        %887 = vmatprep.subr.mxu0 0.0
        %888 = vmatpush1.msra.mxu0 0.0
        %889 = vmatprep.subr.mxu0 0.0
        %890 = vmatpush1.msra.mxu0 0.0
        %891 = vmatprep.subr.mxu0 0.0
        %892 = vmatpush1.msra.mxu0 0.0
        %893 = vmatprep.subr.mxu0 0.0
        %894 = vmatpush1.msra.mxu0 0.0
        %895 = vmatprep.mubr.f32.mxu0 0.0
        %896 = vmatmul.mubr.f32.gmra.mrb[0].mxu0 %v808
        %v897 = vpop.f32.mrb[0].mxu0
        %v898 = vadd.f32 0.0, %v897
        %v899 = vpop.f32.mrb[0].mxu0
        %v900 = vadd.f32 0.0, %v899
        %901 = vmatprep.mubr.f32.mxu0 0.0
        %902 = vmatmul.mubr.f32.gmra.mrb[0].mxu0 %v811
        %v903 = vpop.f32.mrb[0].mxu0
        %v904 = vadd.f32 0.0, %v903
        %v905 = vpop.f32.mrb[0].mxu0
        %v906 = vadd.f32 0.0, %v905
        %907 = vmatprep.mubr.f32.mxu0 0.0
        %908 = vmatmul.mubr.f32.gmra.mrb[0].mxu0 %v814
        %v909 = vpop.f32.mrb[0].mxu0
        %v910 = vadd.f32 0.0, %v909
        %v911 = vpop.f32.mrb[0].mxu0
        %v912 = vadd.f32 0.0, %v911
        %913 = vmatprep.mubr.f32.mxu0 0.0
        %914 = vmatmul.mubr.f32.gmra.mrb[0].mxu0 %v817
        %v915 = vpop.f32.mrb[0].mxu0
        %v916 = vadd.f32 0.0, %v915
        %v917 = vpop.f32.mrb[0].mxu0
        %v918 = vadd.f32 0.0, %v917
        %919 = vmatprep.mubr.f32.mxu0 0.0
        %920 = vmatmul.mubr.f32.gmra.mrb[0].mxu0 %v820
        %v921 = vpop.f32.mrb[0].mxu0
        %v922 = vadd.f32 0.0, %v921
        %v923 = vpop.f32.mrb[0].mxu0
        %v924 = vadd.f32 0.0, %v923
        %925 = vmatprep.mubr.f32.mxu0 0.0
        %926 = vmatmul.mubr.f32.gmra.mrb[0].mxu0 %v823
        %v927 = vpop.f32.mrb[0].mxu0
        %v928 = vadd.f32 0.0, %v927
        %v929 = vpop.f32.mrb[0].mxu0
        %v930 = vadd.f32 0.0, %v929
        %931 = vmatprep.mubr.f32.mxu0 0.0
        %932 = vmatmul.mubr.f32.gmra.mrb[0].mxu0 %v826
        %v933 = vpop.f32.mrb[0].mxu0
        %v934 = vadd.f32 0.0, %v933
        %v935 = vpop.f32.mrb[0].mxu0
        %v936 = vadd.f32 0.0, %v935
        %937 = vmatprep.mubr.f32.mxu0 0.0
        %938 = vmatmul.mubr.f32.gmra.mrb[0].mxu0 %v829
        %v939 = vpop.f32.mrb[0].mxu0
        %v940 = vadd.f32 0.0, %v939
        %v941 = vpop.f32.mrb[0].mxu0
        %v942 = vadd.f32 0.0, %v941
        %943 = vdwg.mxu0
        %944 = vmatprep.subr.mxu0 0.0
        %945 = vmatpush1.msra.mxu0 %v805
        %946 = vmatprep.subr.mxu0 0.0
        %947 = vmatpush1.msra.mxu0 0.0
        %948 = vmatprep.subr.mxu0 0.0
        %949 = vmatpush1.msra.mxu0 0.0
        %950 = vmatprep.subr.mxu0 0.0
        %951 = vmatpush1.msra.mxu0 0.0
        %952 = vmatprep.subr.mxu0 0.0
        %953 = vmatpush1.msra.mxu0 0.0
        %954 = vmatprep.subr.mxu0 0.0
        %955 = vmatpush1.msra.mxu0 0.0
        %956 = vmatprep.subr.mxu0 0.0
        %957 = vmatpush1.msra.mxu0 0.0
        %958 = vmatprep.subr.mxu0 0.0
        %959 = vmatpush1.msra.mxu0 0.0
        %960 = vmatprep.subr.mxu0 0.0
        %961 = vmatpush1.msra.mxu0 0.0
        %962 = vmatprep.subr.mxu0 0.0
        %963 = vmatpush1.msra.mxu0 0.0
        %964 = vmatprep.subr.mxu0 0.0
        %965 = vmatpush1.msra.mxu0 0.0
        %966 = vmatprep.subr.mxu0 0.0
        %967 = vmatpush1.msra.mxu0 0.0
        %968 = vmatprep.subr.mxu0 0.0
        %969 = vmatpush1.msra.mxu0 0.0
        %970 = vmatprep.subr.mxu0 0.0
        %971 = vmatpush1.msra.mxu0 0.0
        %972 = vmatprep.subr.mxu0 0.0
        %973 = vmatpush1.msra.mxu0 0.0
        %974 = vmatprep.subr.mxu0 0.0
        %975 = vmatpush1.msra.mxu0 0.0
        %976 = vmatprep.subr.mxu0 0.0
        %977 = vmatpush1.msra.mxu0 0.0
        %978 = vmatprep.subr.mxu0 0.0
        %979 = vmatpush1.msra.mxu0 0.0
        %980 = vmatprep.subr.mxu0 0.0
        %981 = vmatpush1.msra.mxu0 0.0
        %982 = vmatprep.subr.mxu0 0.0
        %983 = vmatpush1.msra.mxu0 0.0
        %984 = vmatprep.subr.mxu0 0.0
        %985 = vmatpush1.msra.mxu0 0.0
        %986 = vmatprep.subr.mxu0 0.0
        %987 = vmatpush1.msra.mxu0 0.0
        %988 = vmatprep.subr.mxu0 0.0
        %989 = vmatpush1.msra.mxu0 0.0
        %990 = vmatprep.subr.mxu0 0.0
        %991 = vmatpush1.msra.mxu0 0.0
        %992 = vmatprep.subr.mxu0 0.0
        %993 = vmatpush1.msra.mxu0 0.0
        %994 = vmatprep.subr.mxu0 0.0
        %995 = vmatpush1.msra.mxu0 0.0
        %996 = vmatprep.subr.mxu0 0.0
        %997 = vmatpush1.msra.mxu0 0.0
        %998 = vmatprep.subr.mxu0 0.0
        %999 = vmatpush1.msra.mxu0 0.0
        %1000 = vmatprep.subr.mxu0 0.0
        %1001 = vmatpush1.msra.mxu0 0.0
        %1002 = vmatprep.subr.mxu0 0.0
        %1003 = vmatpush1.msra.mxu0 0.0
        %1004 = vmatprep.subr.mxu0 0.0
        %1005 = vmatpush1.msra.mxu0 0.0
        %1006 = vmatprep.subr.mxu0 0.0
        %1007 = vmatpush1.msra.mxu0 0.0
        %1008 = vmatprep.mubr.f32.mxu0 0.0
        %1009 = vmatmul.mubr.f32.gmra.mrb[0].mxu0 %v808
        %v1010 = vpop.f32.mrb[0].mxu0
        %v1011 = vadd.f32 0.0, %v1010
        %v1012 = vpop.f32.mrb[0].mxu0
        %1013 = vmatprep.mubr.f32.mxu0 0.0
        %1014 = vmatmul.mubr.f32.gmra.mrb[0].mxu0 %v811
        %v1015 = vpop.f32.mrb[0].mxu0
        %v1016 = vadd.f32 0.0, %v1015
        %v1017 = vpop.f32.mrb[0].mxu0
        %1018 = vmatprep.mubr.f32.mxu0 0.0
        %1019 = vmatmul.mubr.f32.gmra.mrb[0].mxu0 %v814
        %v1020 = vpop.f32.mrb[0].mxu0
        %v1021 = vadd.f32 0.0, %v1020
        %v1022 = vpop.f32.mrb[0].mxu0
        %1023 = vmatprep.mubr.f32.mxu0 0.0
        %1024 = vmatmul.mubr.f32.gmra.mrb[0].mxu0 %v817
        %v1025 = vpop.f32.mrb[0].mxu0
        %v1026 = vadd.f32 0.0, %v1025
        %v1027 = vpop.f32.mrb[0].mxu0
        %1028 = vmatprep.mubr.f32.mxu0 0.0
        %1029 = vmatmul.mubr.f32.gmra.mrb[0].mxu0 %v820
        %v1030 = vpop.f32.mrb[0].mxu0
        %v1031 = vadd.f32 0.0, %v1030
        %v1032 = vpop.f32.mrb[0].mxu0
        %1033 = vmatprep.mubr.f32.mxu0 0.0
        %1034 = vmatmul.mubr.f32.gmra.mrb[0].mxu0 %v823
        %v1035 = vpop.f32.mrb[0].mxu0
        %v1036 = vadd.f32 0.0, %v1035
        %v1037 = vpop.f32.mrb[0].mxu0
        %1038 = vmatprep.mubr.f32.mxu0 0.0
        %1039 = vmatmul.mubr.f32.gmra.mrb[0].mxu0 %v826
        %v1040 = vpop.f32.mrb[0].mxu0
        %v1041 = vadd.f32 0.0, %v1040
        %v1042 = vpop.f32.mrb[0].mxu0
        %1043 = vmatprep.mubr.f32.mxu0 0.0
        %1044 = vmatmul.mubr.f32.gmra.mrb[0].mxu0 %v829
        %v1045 = vpop.f32.mrb[0].mxu0
        %v1046 = vadd.f32 0.0, %v1045
        %v1047 = vpop.f32.mrb[0].mxu0
        %1048 = vdwg.mxu0
        %v1049 = vmul.f32 %v390, %v898
        %v1050 = vmul.f32 %v392, %v900
        %v1051 = vmul.f32 %v479, %v1011
        %v1052 = vmul.f32 %v396, %v904
        %v1053 = vmul.f32 %v398, %v906
        %v1054 = vmul.f32 %v484, %v1016
        %v1055 = vmul.f32 %v402, %v910
        %v1056 = vmul.f32 %v404, %v912
        %v1057 = vmul.f32 %v489, %v1021
        %v1058 = vmul.f32 %v408, %v916
        %v1059 = vmul.f32 %v410, %v918
        %v1060 = vmul.f32 %v494, %v1026
        %v1061 = vadd.f32 %v1049, %v922
        %v1062 = vadd.f32 %v1050, %v924
        %v1063 = vadd.f32 %v1051, %v1031
        %v1064 = vadd.f32 %v1052, %v928
        %v1065 = vadd.f32 %v1053, %v930
        %v1066 = vadd.f32 %v1054, %v1036
        %v1067 = vadd.f32 %v1055, %v934
        %v1068 = vadd.f32 %v1056, %v936
        %v1069 = vadd.f32 %v1057, %v1041
        %v1070 = vadd.f32 %v1058, %v940
        %v1071 = vadd.f32 %v1059, %v942
        %v1072 = vadd.f32 %v1060, %v1046
        %v1073 = vld [vmem:[%s2] sm:$0x7]
        %v1075 = vlaneseq
        %v1076 = vshrl.u32 %v1075, 7
        %v1077 = vsub.s32 0, %v1076
        %v1078 = vrot.slane %v1073, %v1077
        %v1079 = vlaneseq
        %v1080 = vshrl.u32 %v1079, 7
        %v1081 = vsub.s32 1, %v1080
        %v1082 = vrot.slane %v1073, %v1081
        %v1083 = vlaneseq
        %v1084 = vshrl.u32 %v1083, 7
        %v1085 = vsub.s32 2, %v1084
        %v1086 = vrot.slane %v1073, %v1085
        %v1090 = vmul.f32 %v1061, %v1078
        %v1091 = vmul.f32 %v1062, %v1082
        %v1092 = vmul.f32 %v1063, %v1086
        %v1093 = vmul.f32 %v1064, %v1078
        %v1094 = vmul.f32 %v1065, %v1082
        %v1095 = vmul.f32 %v1066, %v1086
        %v1096 = vmul.f32 %v1067, %v1078
        %v1097 = vmul.f32 %v1068, %v1082
        %v1098 = vmul.f32 %v1069, %v1086
        %v1099 = vmul.f32 %v1070, %v1078
        %v1100 = vmul.f32 %v1071, %v1082
        %v1101 = vmul.f32 %v1072, %v1086
        %v1102 = vld [vmem:[%s3] sm:$0x7]
        %v1104 = vlaneseq
        %v1105 = vshrl.u32 %v1104, 7
        %v1106 = vsub.s32 0, %v1105
        %v1107 = vrot.slane %v1102, %v1106
        %v1108 = vlaneseq
        %v1109 = vshrl.u32 %v1108, 7
        %v1110 = vsub.s32 1, %v1109
        %v1111 = vrot.slane %v1102, %v1110
        %v1112 = vlaneseq
        %v1113 = vshrl.u32 %v1112, 7
        %v1114 = vsub.s32 2, %v1113
        %v1115 = vrot.slane %v1102, %v1114
        %v1119 = vadd.f32 %v1090, %v1107
        %v1120 = vadd.f32 %v1091, %v1111
        %v1121 = vadd.f32 %v1092, %v1115
        %v1122 = vadd.f32 %v1093, %v1107
        %v1123 = vadd.f32 %v1094, %v1111
        %v1124 = vadd.f32 %v1095, %v1115
        %v1125 = vadd.f32 %v1096, %v1107
        %v1126 = vadd.f32 %v1097, %v1111
        %v1127 = vadd.f32 %v1098, %v1115
        %v1128 = vadd.f32 %v1099, %v1107
        %v1129 = vadd.f32 %v1100, %v1111
        %v1130 = vadd.f32 %v1101, %v1115
        %v1131 = vadd.f32 %v294, %v1119
        %v1132 = vadd.f32 %v295, %v1120
        %v1133 = vadd.f32 %v296, %v1121
        %v1134 = vadd.f32 %v297, %v1122
        %v1135 = vadd.f32 %v298, %v1123
        %v1136 = vadd.f32 %v299, %v1124
        %v1137 = vadd.f32 %v300, %v1125
        %v1138 = vadd.f32 %v301, %v1126
        %v1139 = vadd.f32 %v302, %v1127
        %v1140 = vadd.f32 %v303, %v1128
        %v1141 = vadd.f32 %v304, %v1129
        %v1142 = vadd.f32 %v305, %v1130
        %1143 = vst [vmem:[%s291] sm:$0xff] %v1131
        %1144 = vst [vmem:[%s291 + $0x8] sm:$0xff] %v1132
        %1145 = vst [vmem:[%s291 + $0x10] sm:$0xff] %v1133
        %1146 = vst [vmem:[%s291 + $0x18] sm:$0xff] %v1134
        %1147 = vst [vmem:[%s291 + $0x20] sm:$0xff] %v1135
        %1148 = vst [vmem:[%s291 + $0x28] sm:$0xff] %v1136
        %1149 = vst [vmem:[%s291 + $0x30] sm:$0xff] %v1137
        %1150 = vst [vmem:[%s291 + $0x38] sm:$0xff] %v1138
        %1151 = vst [vmem:[%s291 + $0x40] sm:$0xff] %v1139
        %1152 = vst [vmem:[%s291 + $0x48] sm:$0xff] %v1140
        %1153 = vst [vmem:[%s291 + $0x50] sm:$0xff] %v1141
        %1154 = vst [vmem:[%s291 + $0x58] sm:$0xff] %v1142
        %s1155 = sand.u32 %s159, 1
        %s1156 = scalar_lea.sflag [#allocation4], %s1155
        %s1157 = sand.u32 %s159, 1
        %s1158 = smul.addr %s1157, 96
        %s1159 = scalar_lea.vmem [#allocation3], %s1158
        // Predicated region
        $region68: #{tpu_custom_call.1} parent=62 // pred_check
          %p1160 = pneg %p169
        $region69: #{tpu_custom_call.1} parent=62 // pred_check_branch
          %1162 = sbr.rel (%p1160) target = $region71
        $region70: #{tpu_custom_call.1} parent=62 // pred_region
          %s1163 = smul.u32 3, %s20
          %s1165 = ssub.s32 1536, 1536
          %1166 = vsyncadd %s1156, %s1165
          %s1167 = smul.addr %s1163, 128
          %s1168 = scalar_lea.hbm %s6, %s1167
          %s1169 = sshll.u32 %s1159, 4
          %s1170 = int_to_ptr.vmem [resolvable:$true] %s1169
          %1175 = dma.vmem_to_hbm [thread:$0]  %s1170, 1536, %s1168, %s1156, 384, 768, 24
        $region71: #{tpu_custom_call.1} parent=62 // pred_fallthru
          _
      $region63: #{tpu_custom_call.1} parent=5 // pred_fallthru
        _
      %p1176 = scmp.le.s32.totalorder 2, %s15
      // Predicated region
      $region72: #{tpu_custom_call.1} parent=5 // pred_check
        %p1177 = pneg %p1176
      $region73: #{tpu_custom_call.1} parent=5 // pred_check_branch
        %1179 = sbr.rel (%p1177) target = $region75
      $region74: #{tpu_custom_call.1} parent=5 // pred_region
        %s1180 = ssub.s32 %s15, 2
        // Predicated region
        $region76: #{tpu_custom_call.1} parent=74 // pred_check
          %p1181 = pneg %p175
        $region77: #{tpu_custom_call.1} parent=74 // pred_check_branch
          %1183 = sbr.rel (%p1181) target = $region79
        $region78: #{tpu_custom_call.1} parent=74 // pred_region
          %s1184 = sand.u32 %s160, 1
          %s1185 = scalar_lea.sflag [#allocation4], %s1184
          %s1186 = sand.u32 %s160, 1
          %s1187 = smul.addr %s1186, 96
          %s1188 = scalar_lea.vmem [#allocation3], %s1187
          %1189 = dma.done %s1185, 1536
        $region79: #{tpu_custom_call.1} parent=74 // pred_fallthru
          _
      $region75: #{tpu_custom_call.1} parent=5 // pred_fallthru
        _
    $region6: #{tpu_custom_call.1} parent=1 // loop_footer
      %s19 = sadd.s32 1, %s15
    $region7: #{tpu_custom_call.1} parent=1 // loop_footer_branch
      %14 = sbr.rel target = $region3
    $region8: #{tpu_custom_call.1} parent=1 // loop_exit
      _
    %1190 = vsyncpa [#allocation4], 1
    %s1191 = scalar_lea.sflag [#allocation4], 1
    %1192 = vsyncpa %s1191, 1

</llo_original>
